<compile_context>
chip_gen: v7x
topology: tpu7x:2x2x1
jax: 0.10.0
libtpu: 0.0.40
codegen_flags: <defaults>
</compile_context>

<pallas_src>
import functools

import jax
import jax.numpy as jnp
from jax.experimental import pallas as pl
from jax.experimental.pallas import tpu as pltpu


def _round_up(x, m):
    return (x + m - 1) // m * m


# --------------------------------------------------------------------------- #
# Kernel
# --------------------------------------------------------------------------- #
def _agent_kernel(x_ref, w_ref, b_ref, out_ref, *,
                  input_dim, hidden_pad, out_pad, r1):
    """Fused MLP forward: 2x (Linear+ReLU) + one fused head matmul.

    w_ref rows: [0:input_dim]              -> w1  (input_dim, hidden_pad)
                [r1:r1+hidden_pad]         -> w2  (hidden_pad, hidden_pad)
                [r1+hidden_pad: +hidden_pad]-> wh (hidden_pad, out_pad)  heads
    All row/col offsets are (16,128)-tile aligned, so slices are free views.
    """
    wd = w_ref.dtype
    x = x_ref[...].astype(wd)

    w1 = w_ref[0:input_dim, 0:hidden_pad]
    w2 = w_ref[r1:r1 + hidden_pad, 0:hidden_pad]
    wh = w_ref[r1 + hidden_pad:r1 + 2 * hidden_pad, 0:out_pad]

    # Biases are stored in f32 (resident, <2 KB) — no per-step casts.
    b1 = b_ref[:, 0:hidden_pad]
    b2 = b_ref[:, hidden_pad:2 * hidden_pad]
    bh = b_ref[:, 2 * hidden_pad:2 * hidden_pad + out_pad]

    # feature_net (f32 accumulate on the MXU, f32 VPU math)
    h1 = jnp.dot(x, w1, preferred_element_type=jnp.float32) + b1
    h1 = jnp.maximum(h1, 0.0)
    feats = jnp.dot(h1.astype(wd), w2, preferred_element_type=jnp.float32) + b2
    feats = jnp.maximum(feats, 0.0)

    # Fused heads: one matmul, one lane-dense store.
    # Columns = [logits | value | input_prediction | zero padding].
    out = jnp.dot(feats.astype(wd), wh, preferred_element_type=jnp.float32) + bh
    out_ref[...] = out.astype(out_ref.dtype)


# --------------------------------------------------------------------------- #
# Parameter packing (done once, offline)
# --------------------------------------------------------------------------- #
def pack_params(params, dtype=jnp.float32):
    """Pack all weights into one tile-aligned slab and all biases into one f32 row.

    dtype controls the WEIGHT slab only (bf16 pack => full bf16-input matmuls,
    f32 accumulation). Biases are always f32.
    """
    w1, b1 = params["w1"], params["b1"]
    w2, b2 = params["w2"], params["b2"]
    wp, bp = params["wp"], params["bp"]
    wv, bv = params["wv"], params["bv"]
    wq, bq = params["wq"], params["bq"]

    input_dim, hidden = w1.shape
    num_actions = wp.shape[1]
    total_out = num_actions + 1 + input_dim        # logits | value | prediction
    out_pad = _round_up(total_out, 128)            # lane-dense output width
    hidden_pad = _round_up(hidden, 128)            # full-lane hidden width
    r1 = _round_up(input_dim, 16)                  # bf16-tile-aligned row offset

    rows = r1 + 2 * hidden_pad
    wcols = max(hidden_pad, out_pad)

    w_heads = jnp.concatenate([wp, wv, wq], axis=1)   # (hidden, total_out)
    b_heads = jnp.concatenate([bp, bv, bq], axis=1)   # (1, total_out)

    w_all = jnp.zeros((rows, wcols), dtype)
    w_all = w_all.at[0:input_dim, 0:hidden].set(w1.astype(dtype))
    w_all = w_all.at[r1:r1 + hidden, 0:hidden].set(w2.astype(dtype))
    w_all = w_all.at[r1 + hidden_pad:r1 + hidden_pad + hidden,
                     0:total_out].set(w_heads.astype(dtype))

    b_all = jnp.zeros((1, 2 * hidden_pad + out_pad), jnp.float32)
    b_all = b_all.at[:, 0:hidden].set(b1.astype(jnp.float32))
    b_all = b_all.at[:, hidden_pad:hidden_pad + hidden].set(b2.astype(jnp.float32))
    b_all = b_all.at[:, 2 * hidden_pad:2 * hidden_pad + total_out].set(
        b_heads.astype(jnp.float32))

    dims = dict(input_dim=input_dim, hidden=hidden, hidden_pad=hidden_pad,
                num_actions=num_actions, total_out=total_out,
                out_pad=out_pad, r1=r1)
    return {"w_all": w_all, "b_all": b_all, "dims": dims}


# --------------------------------------------------------------------------- #
# Forward wrappers
# --------------------------------------------------------------------------- #
def _choose_batch_tile(B, batch_tile):
    if B <= 256:
        return _round_up(max(B, 1), 8)             # single grid step
    if B <= batch_tile:
        # Guarantee >=2 grid steps so the "parallel" axis can shard across the
        # two TensorCores on v7x (no-op cost on v5e/v6e).
        return _round_up(pl.cdiv(B, 2), 8)
    return batch_tile


def _vmem_limit_bytes(tb, input_dim, hidden_pad, out_pad, out_bytes,
                      w_nbytes, b_nbytes):
    est = (2 * tb * input_dim * 4            # input block, double-buffered (f32)
           + 2 * tb * out_pad * out_bytes    # output block, double-buffered
           + w_nbytes + b_nbytes             # resident params
           + 3 * tb * hidden_pad * 4)        # h1 / feats / out f32 temporaries
    # Generous headroom, capped at 64 MiB (v7x physical VMEM).
    return int(min(64 << 20, max(32 << 20, 2 * est)))


def simple_neural_agent_forward_packed(state, packed, *, batch_tile=4096,
                                       out_dtype=jnp.float32):
    """One pallas_call; returns the fused (B, out_pad) slab.

    Slice logits/value/prediction at the consumer to avoid an extra HBM
    round trip on the (mem-bound) output.
    """
    assert batch_tile % 8 == 0
    w_all, b_all = packed["w_all"], packed["b_all"]
    d = packed["dims"]
    input_dim, hidden_pad, out_pad, r1 = (
        d["input_dim"], d["hidden_pad"], d["out_pad"], d["r1"])

    B = state.shape[0]
    assert state.shape[1] == input_dim

    tb = _choose_batch_tile(B, batch_tile)
    padded_b = pl.cdiv(B, tb) * tb
    if padded_b != B:
        state = jnp.pad(state, ((0, padded_b - B), (0, 0)))

    kernel = functools.partial(
        _agent_kernel, input_dim=input_dim, hidden_pad=hidden_pad,
        out_pad=out_pad, r1=r1)

    out_bytes = jnp.dtype(out_dtype).itemsize
    vmem_limit = _vmem_limit_bytes(tb, input_dim, hidden_pad, out_pad,
                                   out_bytes, w_all.nbytes, b_all.nbytes)

    out = pl.pallas_call(
        kernel,
        out_shape=jax.ShapeDtypeStruct((padded_b, out_pad), out_dtype),
        grid=(padded_b // tb,),
        in_specs=[
            # activations: tiled along the batch axis
            pl.BlockSpec((tb, input_dim), lambda i: (i, 0)),
            # params: constant index_map -> stay resident in VMEM (no re-DMA)
            pl.BlockSpec(w_all.shape, lambda i: (0, 0)),
            pl.BlockSpec(b_all.shape, lambda i: (0, 0)),
        ],
        out_specs=pl.BlockSpec((tb, out_pad), lambda i: (i, 0)),
        compiler_params=pltpu.CompilerParams(
            dimension_semantics=("parallel",),
            vmem_limit_bytes=vmem_limit),
    )(state, w_all, b_all)

    return out[:B]


def simple_neural_agent_forward(state, packed, *, batch_tile=4096,
                                out_dtype=jnp.float32):
    """API-compatible with the PyTorch module: returns (logits, value, prediction)."""
    out = simple_neural_agent_forward_packed(
        state, packed, batch_tile=batch_tile, out_dtype=out_dtype)
    d = packed["dims"]
    na, idim = d["num_actions"], d["input_dim"]
    logits = out[:, :na]
    value = out[:, na:na + 1]
    pred = out[:, na + 1:na + 1 + idim]
    return logits, value, pred


# --------------------------------------------------------------------------- #
# Init + reference
# --------------------------------------------------------------------------- #
def init_params(key, input_dim, hidden_dim=64, num_actions=2):
    """Deterministic parameter init (PyTorch-style uniform fan-in bounds)."""
    def linear(k, fan_in, fan_out):
        kw, kb = jax.random.split(k)
        bound = 1.0 / jnp.sqrt(fan_in)
        w = jax.random.uniform(kw, (fan_in, fan_out), jnp.float32, -bound, bound)
        b = jax.random.uniform(kb, (1, fan_out), jnp.float32, -bound, bound)
        return w, b

    k1, k2, k3, k4, k5 = jax.random.split(key, 5)
    w1, b1 = linear(k1, input_dim, hidden_dim)
    w2, b2 = linear(k2, hidden_dim, hidden_dim)
    wp, bp = linear(k3, hidden_dim, num_actions)
    wv, bv = linear(k4, hidden_dim, 1)
    wq, bq = linear(k5, hidden_dim, input_dim)
    return {"w1": w1, "b1": b1, "w2": w2, "b2": b2,
            "wp": wp, "bp": bp, "wv": wv, "bv": bv, "wq": wq, "bq": bq}


def _reference_forward(state, p):
    """Pure-JAX reference for correctness checks."""
    h = jnp.maximum(state @ p["w1"] + p["b1"], 0.0)
    f = jnp.maximum(h @ p["w2"] + p["b2"], 0.0)
    return f @ p["wp"] + p["bp"], f @ p["wv"] + p["bv"], f @ p["wq"] + p["bq"]


# --------------------------------------------------------------------------- #
# Demo / self-test
# --------------------------------------------------------------------------- #
if __name__ == "__main__":
    input_dim, hidden_dim, num_actions = 16, 64, 2

    key = jax.random.PRNGKey(0)
    kx1, kx2, kp = jax.random.split(key, 3)
    params = init_params(kp, input_dim, hidden_dim, num_actions)

    # --- small batch, f32 params, f32 output: exact check --------------------
    B = 8
    state = jax.random.normal(kx1, (B, input_dim), jnp.float32)
    ref_logits, ref_value, ref_pred = _reference_forward(state, params)

    packed_f32 = pack_params(params, dtype=jnp.float32)
    logits, value, pred = simple_neural_agent_forward(state, packed_f32)
    jax.block_until_ready((logits, value, pred))

    assert logits.shape == (B, num_actions)
    assert value.shape == (B, 1)
    assert pred.shape == (B, input_dim)
    assert jnp.allclose(logits, ref_logits, atol=1e-5)
    assert jnp.allclose(value, ref_value, atol=1e-5)
    assert jnp.allclose(pred, ref_pred, atol=1e-5)

    # --- moderate batch: exercises the 2-step (megacore-friendly) grid path ---
    B2 = 600
    state2 = jax.random.normal(kx2, (B2, input_dim), jnp.float32)
    r2_logits, r2_value, r2_pred = _reference_forward(state2, params)
    l2, v2, p2 = simple_neural_agent_forward(state2, packed_f32)
    jax.block_until_ready((l2, v2, p2))
    assert l2.shape == (B2, num_actions) and v2.shape == (B2, 1) and p2.shape == (B2, input_dim)
    assert jnp.allclose(l2, r2_logits, atol=1e-5)
    assert jnp.allclose(v2, r2_value, atol=1e-5)
    assert jnp.allclose(p2, r2_pred, atol=1e-5)

    # --- bf16 weights+activations on the MXU, bf16 output writeback ----------
    packed_bf16 = pack_params(params, dtype=jnp.bfloat16)
    l16, v16, p16 = simple_neural_agent_forward(
        state2, packed_bf16, out_dtype=jnp.bfloat16)
    jax.block_until_ready((l16, v16, p16))
    l16, v16, p16 = (l16.astype(jnp.float32), v16.astype(jnp.float32),
                     p16.astype(jnp.float32))
    assert jnp.all(jnp.isfinite(l16)) and jnp.all(jnp.isfinite(v16)) and jnp.all(jnp.isfinite(p16))
    assert jnp.allclose(l16, r2_logits, atol=0.25, rtol=0.05)
    assert jnp.allclose(v16, r2_value, atol=0.25, rtol=0.05)
    assert jnp.allclose(p16, r2_pred, atol=0.25, rtol=0.05)

    print("KERNEL_OK")
</pallas_src>

<mosaic_0001>
module attributes {stable_mosaic.version = 11 : i64} {
  func.func @_agent_kernel(%arg0: i32, %arg1: memref<8x16xf32, #tpu.memory_space<vmem>>, %arg2: memref<272x128xf32, #tpu.memory_space<vmem>>, %arg3: memref<1x384xf32, #tpu.memory_space<vmem>>, %arg4: memref<8x128xf32, #tpu.memory_space<vmem>>) attributes {dimension_semantics = [#tpu.dimension_semantics<parallel>], iteration_bounds = array<i64: 1>, scalar_prefetch = 0 : i64, scratch_operands = 0 : i64, tpu.core_type = #tpu.core_type<tc>, window_params = [{transform_indices = @transform_0, window_bounds = array<i64: 8, 16>}, {pipeline_mode = #tpu.pipeline_mode<synchronous>, transform_indices = @transform_1, window_bounds = array<i64: 272, 128>}, {pipeline_mode = #tpu.pipeline_mode<synchronous>, transform_indices = @transform_2, window_bounds = array<i64: 1, 384>}, {transform_indices = @transform_3, window_bounds = array<i64: 8, 128>}]} {
    %c0 = arith.constant 0 : index
    %c0_0 = arith.constant 0 : index
    %0 = vector.load %arg1[%c0, %c0_0] : memref<8x16xf32, #tpu.memory_space<vmem>>, vector<8x16xf32>
    %c0_1 = arith.constant 0 : index
    %c0_2 = arith.constant 0 : index
    %1 = vector.load %arg2[%c0_1, %c0_2] : memref<272x128xf32, #tpu.memory_space<vmem>>, vector<16x128xf32>
    %c16 = arith.constant 16 : index
    %c0_3 = arith.constant 0 : index
    %2 = vector.load %arg2[%c16, %c0_3] : memref<272x128xf32, #tpu.memory_space<vmem>>, vector<128x128xf32>
    %c144 = arith.constant 144 : index
    %c0_4 = arith.constant 0 : index
    %3 = vector.load %arg2[%c144, %c0_4] : memref<272x128xf32, #tpu.memory_space<vmem>>, vector<128x128xf32>
    %c0_5 = arith.constant 0 : index
    %c0_6 = arith.constant 0 : index
    %4 = vector.load %arg3[%c0_5, %c0_6] : memref<1x384xf32, #tpu.memory_space<vmem>>, vector<1x128xf32>
    %c0_7 = arith.constant 0 : index
    %c128 = arith.constant 128 : index
    %5 = vector.load %arg3[%c0_7, %c128] : memref<1x384xf32, #tpu.memory_space<vmem>>, vector<1x128xf32>
    %c0_8 = arith.constant 0 : index
    %c256 = arith.constant 256 : index
    %6 = vector.load %arg3[%c0_8, %c256] : memref<1x384xf32, #tpu.memory_space<vmem>>, vector<1x128xf32>
    %cst = arith.constant dense<0.000000e+00> : vector<8x128xf32>
    %7 = tpu.matmul %0, %1, %cst {dimension_numbers = #tpu.dot_dimension_numbers<[1], [0], [0], [1], [0, 0, 1, 1], [], []>} : vector<8x16xf32>, vector<16x128xf32>, vector<8x128xf32> -> vector<8x128xf32>
    %8 = vector.broadcast %4 : vector<1x128xf32> to vector<8x128xf32>
    %9 = arith.addf %7, %8 : vector<8x128xf32>
    %cst_9 = arith.constant 0.000000e+00 : f32
    %10 = vector.broadcast %cst_9 : f32 to vector<8x128xf32>
    %11 = arith.maximumf %9, %10 : vector<8x128xf32>
    %cst_10 = arith.constant dense<0.000000e+00> : vector<8x128xf32>
    %12 = tpu.matmul %11, %2, %cst_10 {dimension_numbers = #tpu.dot_dimension_numbers<[1], [0], [0], [1], [0, 0, 1, 1], [], []>} : vector<8x128xf32>, vector<128x128xf32>, vector<8x128xf32> -> vector<8x128xf32>
    %13 = vector.broadcast %5 : vector<1x128xf32> to vector<8x128xf32>
    %14 = arith.addf %12, %13 : vector<8x128xf32>
    %cst_11 = arith.constant 0.000000e+00 : f32
    %15 = vector.broadcast %cst_11 : f32 to vector<8x128xf32>
    %16 = arith.maximumf %14, %15 : vector<8x128xf32>
    %cst_12 = arith.constant dense<0.000000e+00> : vector<8x128xf32>
    %17 = tpu.matmul %16, %3, %cst_12 {dimension_numbers = #tpu.dot_dimension_numbers<[1], [0], [0], [1], [0, 0, 1, 1], [], []>} : vector<8x128xf32>, vector<128x128xf32>, vector<8x128xf32> -> vector<8x128xf32>
    %18 = vector.broadcast %6 : vector<1x128xf32> to vector<8x128xf32>
    %19 = arith.addf %17, %18 : vector<8x128xf32>
    %c0_13 = arith.constant 0 : index
    %c0_14 = arith.constant 0 : index
    %20 = vector.load %arg4[%c0_13, %c0_14] : memref<8x128xf32, #tpu.memory_space<vmem>>, vector<8x128xf32>
    tpu.vector_store %arg4[%c0_13, %c0_14], %19 {strides = array<i32>} : memref<8x128xf32, #tpu.memory_space<vmem>>, vector<8x128xf32>,
    return
  }
  func.func @transform_0(%arg0: i32) -> (i32, i32) {
    %c0_i32 = arith.constant 0 : i32
    %c0_i32_0 = arith.constant 0 : i32
    return %arg0, %c0_i32 : i32, i32
  }
  func.func @transform_1(%arg0: i32) -> (i32, i32) {
    %c0_i32 = arith.constant 0 : i32
    %c0_i32_0 = arith.constant 0 : i32
    %c0_i32_1 = arith.constant 0 : i32
    return %c0_i32, %c0_i32_0 : i32, i32
  }
  func.func @transform_2(%arg0: i32) -> (i32, i32) {
    %c0_i32 = arith.constant 0 : i32
    %c0_i32_0 = arith.constant 0 : i32
    %c0_i32_1 = arith.constant 0 : i32
    return %c0_i32, %c0_i32_0 : i32, i32
  }
  func.func @transform_3(%arg0: i32) -> (i32, i32) {
    %c0_i32 = arith.constant 0 : i32
    %c0_i32_0 = arith.constant 0 : i32
    return %arg0, %c0_i32 : i32, i32
  }
}

</mosaic_0001>

<llo_original>
// kernel: tpu_custom_call.1
$region0: #{tpu_custom_call.1}
  #allocation0 [shape = 'u32[]', space=smem, size = 0x4, offset = 0x4, fixed_abs, tag = 'smem constant byte address 0x4 - core index']
  #allocation1 [shape = 'u32[144,128]{1,0:T(1,128)}', space=vmem, size = 0x12000, scoped, tag = 'internal scratch']
  %s0 = inlined_call_operand.hbm [shape: f32[8,16], index: 0, kind: input, shape index: {}]
  %s1 = inlined_call_operand.hbm [shape: f32[272,128], index: 1, kind: input, shape index: {}]
  %s2 = inlined_call_operand.vmem [shape: f32[1,384], index: 2, kind: input, shape index: {}]
  %s3 = inlined_call_operand.hbm [shape: f32[8,128], index: 3, kind: output, shape index: {}]
  %s4 = sld [smem:[#allocation0]]
  $region30: #{tpu_custom_call.1} parent=0
    _
  %s6 = ssub.s32 1, %s4
  %s7 = scalar_select 0, %s6, %s4
  $region1: #{tpu_custom_call.1} parent=0
    #allocation2 [shape = 'u8[4096]{0}', space=vmem, size = 0x1000, scoped, tag = 'input window, operand 0, single buffered']
    #allocation3 [shape = 's32[1]{0}', space=sflag, size = 0x4, scoped, tag = 'scoped memory for tpu_custom_call.1']
    #allocation4 [shape = 's32[1]{0}', space=sflag, size = 0x4, scoped, tag = 'scoped memory for tpu_custom_call.1']
    #allocation5 [shape = 'u8[139264]{0}', space=vmem, size = 0x22000, scoped, tag = 'input window, operand 1, single buffered']
    #allocation6 [shape = 's32[1]{0}', space=sflag, size = 0x4, scoped, tag = 'scoped memory for tpu_custom_call.1']
    #allocation7 [shape = 'u8[4096]{0}', space=vmem, size = 0x1000, scoped, tag = 'output window, operand 0, single buffered']
    %8 = vsyncpa [#allocation3], 0
    %9 = vsyncpa [#allocation6], 0
    %10 = vsyncpa [#allocation4], 0
    // Predicated region
    $region2: #{tpu_custom_call.1} parent=1 // pred_check
      _
    $region3: #{tpu_custom_call.1} parent=1 // pred_check_branch
      %12 = sbr.rel (0) target = $region5
    $region4: #{tpu_custom_call.1} parent=1 // pred_region
      %s14 = ssub.s32 128, 128
      %15 = vsyncadd [#allocation3], %s14
      %s17 = sshll.u32 [#allocation2], 4
      %s18 = int_to_ptr.vmem [resolvable:$true] %s17
      %20 = dma.hbm_to_vmem [thread:$0]  %s0, 128, %s18, [#allocation3]
    $region5: #{tpu_custom_call.1} parent=1 // pred_fallthru
      _
    // Predicated region
    $region6: #{tpu_custom_call.1} parent=1 // pred_check
      _
    $region7: #{tpu_custom_call.1} parent=1 // pred_check_branch
      %22 = sbr.rel (0) target = $region9
    $region8: #{tpu_custom_call.1} parent=1 // pred_region
      %s24 = ssub.s32 4352, 4352
      %25 = vsyncadd [#allocation6], %s24
      %s26 = sshll.u32 [#allocation5], 4
      %s27 = int_to_ptr.vmem [resolvable:$true] %s26
      %32 = dma.hbm_to_vmem [thread:$0]  %s1, 4352, %s27, [#allocation6], 128, 128, 8
    $region9: #{tpu_custom_call.1} parent=1 // pred_fallthru
      _
    // Predicated region
    $region10: #{tpu_custom_call.1} parent=1 // pred_check
      _
    $region11: #{tpu_custom_call.1} parent=1 // pred_check_branch
      %34 = sbr.rel (0) target = $region13
    $region12: #{tpu_custom_call.1} parent=1 // pred_region
      _
    $region13: #{tpu_custom_call.1} parent=1 // pred_fallthru
      _
    // Predicated region
    $region14: #{tpu_custom_call.1} parent=1 // pred_check
      _
    $region15: #{tpu_custom_call.1} parent=1 // pred_check_branch
      %36 = sbr.rel (0) target = $region17
    $region16: #{tpu_custom_call.1} parent=1 // pred_region
      %37 = dma.done [#allocation3], 128
    $region17: #{tpu_custom_call.1} parent=1 // pred_fallthru
      _
    // Predicated region
    $region18: #{tpu_custom_call.1} parent=1 // pred_check
      _
    $region19: #{tpu_custom_call.1} parent=1 // pred_check_branch
      %39 = sbr.rel (0) target = $region21
    $region20: #{tpu_custom_call.1} parent=1 // pred_region
      %40 = dma.done [#allocation6], 4352
    $region21: #{tpu_custom_call.1} parent=1 // pred_fallthru
      _
    %v41 = vld [vmem:[#allocation2] sm:$0xff]
    %v42 = vld [vmem:[#allocation5] sm:$0xff]
    %v43 = vld [vmem:[#allocation5 + $0x8] sm:$0xff]
    %v44 = vld [vmem:[#allocation5 + $0x10] sm:$0xff]
    %v45 = vld [vmem:[#allocation5 + $0x18] sm:$0xff]
    %v46 = vld [vmem:[#allocation5 + $0x20] sm:$0xff]
    %v47 = vld [vmem:[#allocation5 + $0x28] sm:$0xff]
    %v48 = vld [vmem:[#allocation5 + $0x30] sm:$0xff]
    %v49 = vld [vmem:[#allocation5 + $0x38] sm:$0xff]
    %v50 = vld [vmem:[#allocation5 + $0x40] sm:$0xff]
    %v51 = vld [vmem:[#allocation5 + $0x48] sm:$0xff]
    %v52 = vld [vmem:[#allocation5 + $0x50] sm:$0xff]
    %v53 = vld [vmem:[#allocation5 + $0x58] sm:$0xff]
    %v54 = vld [vmem:[#allocation5 + $0x60] sm:$0xff]
    %v55 = vld [vmem:[#allocation5 + $0x68] sm:$0xff]
    %v56 = vld [vmem:[#allocation5 + $0x70] sm:$0xff]
    %v57 = vld [vmem:[#allocation5 + $0x78] sm:$0xff]
    %v58 = vld [vmem:[#allocation5 + $0x80] sm:$0xff]
    %v59 = vld [vmem:[#allocation5 + $0x88] sm:$0xff]
    %v60 = vld [vmem:[#allocation5 + $0x90] sm:$0xff]
    %v61 = vld [vmem:[#allocation5 + $0x98] sm:$0xff]
    %v62 = vld [vmem:[#allocation5 + $0xa0] sm:$0xff]
    %v63 = vld [vmem:[#allocation5 + $0xa8] sm:$0xff]
    %v64 = vld [vmem:[#allocation5 + $0xb0] sm:$0xff]
    %v65 = vld [vmem:[#allocation5 + $0xb8] sm:$0xff]
    %v66 = vld [vmem:[#allocation5 + $0xc0] sm:$0xff]
    %v67 = vld [vmem:[#allocation5 + $0xc8] sm:$0xff]
    %v68 = vld [vmem:[#allocation5 + $0xd0] sm:$0xff]
    %v69 = vld [vmem:[#allocation5 + $0xd8] sm:$0xff]
    %v70 = vld [vmem:[#allocation5 + $0xe0] sm:$0xff]
    %v71 = vld [vmem:[#allocation5 + $0xe8] sm:$0xff]
    %v72 = vld [vmem:[#allocation5 + $0xf0] sm:$0xff]
    %v73 = vld [vmem:[#allocation5 + $0xf8] sm:$0xff]
    %v74 = vld [vmem:[#allocation5 + $0x100] sm:$0xff]
    %v75 = vld [vmem:[#allocation5 + $0x108] sm:$0xff]
    %v76 = vld [vmem:[%s2] sm:$0x1]
    %v77 = vld [vmem:[%s2 + $0x1] sm:$0x1]
    %v78 = vld [vmem:[%s2 + $0x2] sm:$0x1]
    %v80 = vlaneseq
    %v81 = vshrl.u32 %v80, 7
    %v82 = vsub.s32 0, %v81
    %v83 = vrot.slane %v76, %v82
    %vm85 = vcmask 130048
    %v87 = vsel %vm85, %v41, 0
    %89 = vmatprep.subr.mxu0 0.0
    %90 = vmatpush1.msra.mxu0 %v42
    %91 = vmatprep.subr.mxu0 0.0
    %92 = vmatpush1.msra.mxu0 %v43
    %93 = vmatprep.subr.mxu0 0.0
    %94 = vmatpush1.msra.mxu0 0.0
    %95 = vmatprep.subr.mxu0 0.0
    %96 = vmatpush1.msra.mxu0 0.0
    %97 = vmatprep.subr.mxu0 0.0
    %98 = vmatpush1.msra.mxu0 0.0
    %99 = vmatprep.subr.mxu0 0.0
    %100 = vmatpush1.msra.mxu0 0.0
    %101 = vmatprep.subr.mxu0 0.0
    %102 = vmatpush1.msra.mxu0 0.0
    %103 = vmatprep.subr.mxu0 0.0
    %104 = vmatpush1.msra.mxu0 0.0
    %105 = vmatprep.subr.mxu0 0.0
    %106 = vmatpush1.msra.mxu0 0.0
    %107 = vmatprep.subr.mxu0 0.0
    %108 = vmatpush1.msra.mxu0 0.0
    %109 = vmatprep.subr.mxu0 0.0
    %110 = vmatpush1.msra.mxu0 0.0
    %111 = vmatprep.subr.mxu0 0.0
    %112 = vmatpush1.msra.mxu0 0.0
    %113 = vmatprep.subr.mxu0 0.0
    %114 = vmatpush1.msra.mxu0 0.0
    %115 = vmatprep.subr.mxu0 0.0
    %116 = vmatpush1.msra.mxu0 0.0
    %117 = vmatprep.subr.mxu0 0.0
    %118 = vmatpush1.msra.mxu0 0.0
    %119 = vmatprep.subr.mxu0 0.0
    %120 = vmatpush1.msra.mxu0 0.0
    %121 = vmatprep.subr.mxu0 0.0
    %122 = vmatpush1.msra.mxu0 0.0
    %123 = vmatprep.subr.mxu0 0.0
    %124 = vmatpush1.msra.mxu0 0.0
    %125 = vmatprep.subr.mxu0 0.0
    %126 = vmatpush1.msra.mxu0 0.0
    %127 = vmatprep.subr.mxu0 0.0
    %128 = vmatpush1.msra.mxu0 0.0
    %129 = vmatprep.subr.mxu0 0.0
    %130 = vmatpush1.msra.mxu0 0.0
    %131 = vmatprep.subr.mxu0 0.0
    %132 = vmatpush1.msra.mxu0 0.0
    %133 = vmatprep.subr.mxu0 0.0
    %134 = vmatpush1.msra.mxu0 0.0
    %135 = vmatprep.subr.mxu0 0.0
    %136 = vmatpush1.msra.mxu0 0.0
    %137 = vmatprep.subr.mxu0 0.0
    %138 = vmatpush1.msra.mxu0 0.0
    %139 = vmatprep.subr.mxu0 0.0
    %140 = vmatpush1.msra.mxu0 0.0
    %141 = vmatprep.subr.mxu0 0.0
    %142 = vmatpush1.msra.mxu0 0.0
    %143 = vmatprep.subr.mxu0 0.0
    %144 = vmatpush1.msra.mxu0 0.0
    %145 = vmatprep.subr.mxu0 0.0
    %146 = vmatpush1.msra.mxu0 0.0
    %147 = vmatprep.subr.mxu0 0.0
    %148 = vmatpush1.msra.mxu0 0.0
    %149 = vmatprep.subr.mxu0 0.0
    %150 = vmatpush1.msra.mxu0 0.0
    %151 = vmatprep.subr.mxu0 0.0
    %152 = vmatpush1.msra.mxu0 0.0
    %153 = vmatprep.mubr.f32.mxu0 0.0
    %154 = vmatmul.mubr.f32.gmra.mrb[0].mxu0 %v87
    %v155 = vpop.f32.mrb[0].mxu0
    %v156 = vadd.f32 %v83, %v155
    %v157 = vpop.f32.mrb[0].mxu0
    %158 = vdwg.mxu0
    %v159 = vmax.f32 %v156, 0.0
    %v161 = vlaneseq
    %v162 = vshrl.u32 %v161, 7
    %v163 = vsub.s32 0, %v162
    %v164 = vrot.slane %v77, %v163
    %166 = vmatprep.subr.mxu0 0.0
    %167 = vmatpush1.msra.mxu0 %v44
    %168 = vmatprep.subr.mxu0 0.0
    %169 = vmatpush1.msra.mxu0 %v45
    %170 = vmatprep.subr.mxu0 0.0
    %171 = vmatpush1.msra.mxu0 %v46
    %172 = vmatprep.subr.mxu0 0.0
    %173 = vmatpush1.msra.mxu0 %v47
    %174 = vmatprep.subr.mxu0 0.0
    %175 = vmatpush1.msra.mxu0 %v48
    %176 = vmatprep.subr.mxu0 0.0
    %177 = vmatpush1.msra.mxu0 %v49
    %178 = vmatprep.subr.mxu0 0.0
    %179 = vmatpush1.msra.mxu0 %v50
    %180 = vmatprep.subr.mxu0 0.0
    %181 = vmatpush1.msra.mxu0 %v51
    %182 = vmatprep.subr.mxu0 0.0
    %183 = vmatpush1.msra.mxu0 %v52
    %184 = vmatprep.subr.mxu0 0.0
    %185 = vmatpush1.msra.mxu0 %v53
    %186 = vmatprep.subr.mxu0 0.0
    %187 = vmatpush1.msra.mxu0 %v54
    %188 = vmatprep.subr.mxu0 0.0
    %189 = vmatpush1.msra.mxu0 %v55
    %190 = vmatprep.subr.mxu0 0.0
    %191 = vmatpush1.msra.mxu0 %v56
    %192 = vmatprep.subr.mxu0 0.0
    %193 = vmatpush1.msra.mxu0 %v57
    %194 = vmatprep.subr.mxu0 0.0
    %195 = vmatpush1.msra.mxu0 %v58
    %196 = vmatprep.subr.mxu0 0.0
    %197 = vmatpush1.msra.mxu0 %v59
    %198 = vmatprep.subr.mxu0 0.0
    %199 = vmatpush1.msra.mxu0 0.0
    %200 = vmatprep.subr.mxu0 0.0
    %201 = vmatpush1.msra.mxu0 0.0
    %202 = vmatprep.subr.mxu0 0.0
    %203 = vmatpush1.msra.mxu0 0.0
    %204 = vmatprep.subr.mxu0 0.0
    %205 = vmatpush1.msra.mxu0 0.0
    %206 = vmatprep.subr.mxu0 0.0
    %207 = vmatpush1.msra.mxu0 0.0
    %208 = vmatprep.subr.mxu0 0.0
    %209 = vmatpush1.msra.mxu0 0.0
    %210 = vmatprep.subr.mxu0 0.0
    %211 = vmatpush1.msra.mxu0 0.0
    %212 = vmatprep.subr.mxu0 0.0
    %213 = vmatpush1.msra.mxu0 0.0
    %214 = vmatprep.subr.mxu0 0.0
    %215 = vmatpush1.msra.mxu0 0.0
    %216 = vmatprep.subr.mxu0 0.0
    %217 = vmatpush1.msra.mxu0 0.0
    %218 = vmatprep.subr.mxu0 0.0
    %219 = vmatpush1.msra.mxu0 0.0
    %220 = vmatprep.subr.mxu0 0.0
    %221 = vmatpush1.msra.mxu0 0.0
    %222 = vmatprep.subr.mxu0 0.0
    %223 = vmatpush1.msra.mxu0 0.0
    %224 = vmatprep.subr.mxu0 0.0
    %225 = vmatpush1.msra.mxu0 0.0
    %226 = vmatprep.subr.mxu0 0.0
    %227 = vmatpush1.msra.mxu0 0.0
    %228 = vmatprep.subr.mxu0 0.0
    %229 = vmatpush1.msra.mxu0 0.0
    %230 = vmatprep.mubr.f32.mxu0 0.0
    %231 = vmatmul.mubr.f32.gmra.mrb[0].mxu0 %v159
    %v232 = vpop.f32.mrb[0].mxu0
    %v233 = vadd.f32 %v164, %v232
    %v234 = vpop.f32.mrb[0].mxu0
    %235 = vdwg.mxu0
    %v236 = vmax.f32 %v233, 0.0
    %v238 = vlaneseq
    %v239 = vshrl.u32 %v238, 7
    %v240 = vsub.s32 0, %v239
    %v241 = vrot.slane %v78, %v240
    %243 = vmatprep.subr.mxu0 0.0
    %244 = vmatpush1.msra.mxu0 %v60
    %245 = vmatprep.subr.mxu0 0.0
    %246 = vmatpush1.msra.mxu0 %v61
    %247 = vmatprep.subr.mxu0 0.0
    %248 = vmatpush1.msra.mxu0 %v62
    %249 = vmatprep.subr.mxu0 0.0
    %250 = vmatpush1.msra.mxu0 %v63
    %251 = vmatprep.subr.mxu0 0.0
    %252 = vmatpush1.msra.mxu0 %v64
    %253 = vmatprep.subr.mxu0 0.0
    %254 = vmatpush1.msra.mxu0 %v65
    %255 = vmatprep.subr.mxu0 0.0
    %256 = vmatpush1.msra.mxu0 %v66
    %257 = vmatprep.subr.mxu0 0.0
    %258 = vmatpush1.msra.mxu0 %v67
    %259 = vmatprep.subr.mxu0 0.0
    %260 = vmatpush1.msra.mxu0 %v68
    %261 = vmatprep.subr.mxu0 0.0
    %262 = vmatpush1.msra.mxu0 %v69
    %263 = vmatprep.subr.mxu0 0.0
    %264 = vmatpush1.msra.mxu0 %v70
    %265 = vmatprep.subr.mxu0 0.0
    %266 = vmatpush1.msra.mxu0 %v71
    %267 = vmatprep.subr.mxu0 0.0
    %268 = vmatpush1.msra.mxu0 %v72
    %269 = vmatprep.subr.mxu0 0.0
    %270 = vmatpush1.msra.mxu0 %v73
    %271 = vmatprep.subr.mxu0 0.0
    %272 = vmatpush1.msra.mxu0 %v74
    %273 = vmatprep.subr.mxu0 0.0
    %274 = vmatpush1.msra.mxu0 %v75
    %275 = vmatprep.subr.mxu0 0.0
    %276 = vmatpush1.msra.mxu0 0.0
    %277 = vmatprep.subr.mxu0 0.0
    %278 = vmatpush1.msra.mxu0 0.0
    %279 = vmatprep.subr.mxu0 0.0
    %280 = vmatpush1.msra.mxu0 0.0
    %281 = vmatprep.subr.mxu0 0.0
    %282 = vmatpush1.msra.mxu0 0.0
    %283 = vmatprep.subr.mxu0 0.0
    %284 = vmatpush1.msra.mxu0 0.0
    %285 = vmatprep.subr.mxu0 0.0
    %286 = vmatpush1.msra.mxu0 0.0
    %287 = vmatprep.subr.mxu0 0.0
    %288 = vmatpush1.msra.mxu0 0.0
    %289 = vmatprep.subr.mxu0 0.0
    %290 = vmatpush1.msra.mxu0 0.0
    %291 = vmatprep.subr.mxu0 0.0
    %292 = vmatpush1.msra.mxu0 0.0
    %293 = vmatprep.subr.mxu0 0.0
    %294 = vmatpush1.msra.mxu0 0.0
    %295 = vmatprep.subr.mxu0 0.0
    %296 = vmatpush1.msra.mxu0 0.0
    %297 = vmatprep.subr.mxu0 0.0
    %298 = vmatpush1.msra.mxu0 0.0
    %299 = vmatprep.subr.mxu0 0.0
    %300 = vmatpush1.msra.mxu0 0.0
    %301 = vmatprep.subr.mxu0 0.0
    %302 = vmatpush1.msra.mxu0 0.0
    %303 = vmatprep.subr.mxu0 0.0
    %304 = vmatpush1.msra.mxu0 0.0
    %305 = vmatprep.subr.mxu0 0.0
    %306 = vmatpush1.msra.mxu0 0.0
    %307 = vmatprep.mubr.f32.mxu0 0.0
    %308 = vmatmul.mubr.f32.gmra.mrb[0].mxu0 %v236
    %v309 = vpop.f32.mrb[0].mxu0
    %v310 = vadd.f32 %v241, %v309
    %v311 = vpop.f32.mrb[0].mxu0
    %312 = vdwg.mxu0
    %313 = vst [vmem:[#allocation7] sm:$0xff] %v310
    // Predicated region
    $region22: #{tpu_custom_call.1} parent=1 // pred_check
      _
    $region23: #{tpu_custom_call.1} parent=1 // pred_check_branch
      %315 = sbr.rel (0) target = $region25
    $region24: #{tpu_custom_call.1} parent=1 // pred_region
      %s317 = ssub.s32 128, 128
      %318 = vsyncadd [#allocation4], %s317
      %s320 = sshll.u32 [#allocation7], 4
      %s321 = int_to_ptr.vmem [resolvable:$true] %s320
      %323 = dma.vmem_to_hbm [thread:$0]  %s321, 128, %s3, [#allocation4]
    $region25: #{tpu_custom_call.1} parent=1 // pred_fallthru
      _
    // Predicated region
    $region26: #{tpu_custom_call.1} parent=1 // pred_check
      _
    $region27: #{tpu_custom_call.1} parent=1 // pred_check_branch
      %325 = sbr.rel (0) target = $region29
    $region28: #{tpu_custom_call.1} parent=1 // pred_region
      %326 = dma.done [#allocation4], 128
    $region29: #{tpu_custom_call.1} parent=1 // pred_fallthru
      _
    %327 = vsyncpa [#allocation3], 1
    %328 = vsyncpa [#allocation6], 1
    %329 = vsyncpa [#allocation4], 1

</llo_original>
